<compile_context>
chip_gen: v5e
topology: v5e:2x2
jax: 0.10.0
libtpu: 0.0.40
codegen_flags: <defaults>
</compile_context>

<pallas_src>
import functools

import jax
import jax.numpy as jnp
from jax.experimental import pallas as pl
from jax.experimental.pallas import tpu as pltpu

_MIB = 1024 * 1024


# ----------------------------------------------------------------------------- kernel
def _transposed_ln_kernel(m_ref, s_ref, x_ref, o_ref, *, use_mxu, eps):
    # m_ref, s_ref: (1,) f32 scalars in SMEM.
    # x_ref, o_ref: (D, TL) tile in VMEM (batch dim squeezed by the BlockSpec).
    D = x_ref.shape[0]
    inv_d = jnp.float32(1.0 / D)

    if use_mxu:
        # bf16 path: reduce over D on the MXU (f32 accumulation), freeing VALU slots.
        xb = x_ref[...]                                     # (D, TL) bf16
        pivot_b = xb[0:1, :]                                # per-lane pivot (conditioning)
        xc = xb - pivot_b                                   # centered, bf16
        ones = jnp.ones((1, D), xb.dtype)
        sum_c = jnp.dot(ones, xc, preferred_element_type=jnp.float32)        # (1, TL)
        sum_c2 = jnp.dot(ones, xc * xc, preferred_element_type=jnp.float32)  # (1, TL)
        pivot = pivot_b.astype(jnp.float32)
    else:
        # f32 (and generic) path: fused single sweep on the VPU.
        xf = x_ref[...].astype(jnp.float32)                 # (D, TL)
        pivot = xf[0:1, :]                                  # per-lane pivot (conditioning)
        xc = xf - pivot
        sum_c = jnp.sum(xc, axis=0, keepdims=True)          # (1, TL)
        sum_c2 = jnp.sum(xc * xc, axis=0, keepdims=True)    # (1, TL)

    mean_c = sum_c * inv_d
    var = jnp.maximum(sum_c2 * inv_d - mean_c * mean_c, 0.0)   # unbiased=False
    if eps:
        var = var + jnp.float32(eps)
    inv_std = jax.lax.rsqrt(var)                            # EUP; == 1/std (eps=0 matches torch)
    mean = mean_c + pivot                                   # (1, TL)

    scale = s_ref[0] * inv_std                              # (1, TL)
    shift = mean - m_ref[0]                                 # fold +m into the shift once per lane

    # Second pass re-reads the tile from VMEM (hidden under HBM time) so the f32
    # working copy from the moment pass does not have to stay live.
    o_ref[...] = (scale * (x_ref[...].astype(jnp.float32) - shift)).astype(o_ref.dtype)


# ------------------------------------------------------------------------- tile sizing
def _per_lane_bytes(D, itemsize):
    # Double-buffered input + output tiles plus ~one f32 working temporary per element
    # (the long-lived f32 copy of the tile was removed from the kernel body).
    return D * (4 * itemsize + 4)


def _vmem_capacity_bytes():
    try:
        cap = int(pltpu.get_tpu_info().vmem_capacity_bytes)
        if cap > 0:
            return max(cap, 32 * _MIB)
    except Exception:
        pass
    # Conservative fallback = v7x per-TensorCore VMEM (v5e/v6e have 128 MiB).
    return 64 * _MIB


def _default_vmem_budget(cap_bytes):
    # ~68% of physical VMEM (v7x: 64 MiB -> ~43 MiB), capped at 44 MiB on the
    # 128 MiB chips since throughput plateaus around TL=1024-2048.
    return int(min(44 * _MIB, max(12 * _MIB, (cap_bytes * 17) // 25)))


def _choose_lane_tile(B, D, L, itemsize, budget_bytes, *, min_grid_blocks=8):
    """Largest 128-aligned lane tile fitting the VMEM budget, shrunk (down to a DMA
    run-length floor) until the grid has enough blocks for both v7x TensorCores."""
    per_lane = _per_lane_bytes(D, itemsize)
    budget_tl = (budget_bytes // max(per_lane, 1)) // 128 * 128
    budget_tl = int(min(max(budget_tl, 128), 2048))
    # bf16 at TL=128 is only 256 B per contiguous run -> poor HBM efficiency.
    min_tl = 512 if itemsize < 4 else 128
    if L <= min_tl:
        return L  # single tile covering all of L (block == full dim, always legal)

    max_blocks = B * pl.cdiv(L, min_tl)
    target_blocks = min(min_grid_blocks, max_blocks)
    tl = budget_tl
    while tl > min_tl and B * pl.cdiv(L, tl) < target_blocks:
        tl -= 128
    tl = max(tl, min_tl)
    return L if tl >= L else tl


# ----------------------------------------------------------------------------- wrapper
def transposed_ln(x, m, s, *, lane_tile=None, vmem_budget_bytes=None, eps=0.0):
    """TransposedLN (scalar=True). x: (B, D, L); m, s: (1,) float32 scalar parameters."""
    B, D, L = x.shape
    itemsize = x.dtype.itemsize

    cap = _vmem_capacity_bytes()
    budget = int(vmem_budget_bytes) if vmem_budget_bytes is not None else _default_vmem_budget(cap)
    TL = lane_tile if lane_tile is not None else _choose_lane_tile(B, D, L, itemsize, budget)

    # Explicit VMEM limit covering the true tile footprint (plus headroom), clamped
    # below physical capacity — never rely on the 16/32 MiB scoped default.
    footprint = _per_lane_bytes(D, itemsize) * TL
    vmem_limit = int(min(max(32 * _MIB, footprint + 8 * _MIB), cap - 2 * _MIB))
    # TODO(synk): for D so large that even the minimum lane tile exceeds physical VMEM,
    # split D across an extra "arbitrary" grid axis with partial (sum, sum_sq) scratch.

    # bf16 I/O with non-trivial D: offload the D-reduction to the MXU (see kernel).
    use_mxu = (x.dtype == jnp.bfloat16) and (D >= 128)

    kernel = functools.partial(_transposed_ln_kernel, use_mxu=use_mxu, eps=float(eps))
    grid = (B, pl.cdiv(L, TL))
    # TODO(synk): for very small D with few L tiles, a (Bt, D, TL) batch-blocked spec
    # would amortize per-step overhead; not needed at these shapes.
    return pl.pallas_call(
        kernel,
        out_shape=jax.ShapeDtypeStruct((B, D, L), x.dtype),
        grid=grid,
        in_specs=[
            pl.BlockSpec(memory_space=pltpu.MemorySpace.SMEM),        # m (1,)
            pl.BlockSpec(memory_space=pltpu.MemorySpace.SMEM),        # s (1,)
            pl.BlockSpec((None, D, TL), lambda b, l: (b, 0, l)),      # x tile
        ],
        out_specs=pl.BlockSpec((None, D, TL), lambda b, l: (b, 0, l)),
        compiler_params=pltpu.CompilerParams(
            dimension_semantics=("parallel", "parallel"),
            vmem_limit_bytes=vmem_limit),
    )(m, s, x)


# --------------------------------------------------------------------------- reference
def _reference(x, m, s):
    xf = x.astype(jnp.float32)
    mean = jnp.mean(xf, axis=1, keepdims=True)
    std = jnp.sqrt(jnp.mean((xf - mean) ** 2, axis=1, keepdims=True))
    return s[0] / std * (xf - mean + m[0])


# TODO(synk): the scalar=False branch (plain nn.LayerNorm over the channel dim after a
# transpose) is not exercised by the module defaults and is not implemented here.

if __name__ == "__main__":
    key = jax.random.PRNGKey(0)

    # Deterministic parameter init, matching nn.Parameter(torch.zeros(1)/ones(1)).
    m = jnp.zeros((1,), jnp.float32)
    s = jnp.ones((1,), jnp.float32)

    # Case 1: small module-like shape (single lane tile covers all of L).
    B, D, L = 2, 4, 16
    x = jax.random.normal(key, (B, D, L), dtype=jnp.float32)
    y = transposed_ln(x, m, s)
    jax.block_until_ready(y)
    assert jnp.allclose(y, _reference(x, m, s), atol=1e-5, rtol=1e-5), "mismatch (small case)"

    # Case 2: auto-chosen lane tiling — exercises the tiled-L path and the
    # dual-TensorCore block-count guard (grid = (2, 2) here).
    x2 = jax.random.normal(jax.random.PRNGKey(1), (2, 8, 256), dtype=jnp.float32)
    y2 = transposed_ln(x2, m, s)
    jax.block_until_ready(y2)
    assert jnp.allclose(y2, _reference(x2, m, s), atol=1e-5, rtol=1e-5), "mismatch (tiled case)"

    # Case 3: bf16 I/O with D >= 128 — exercises the MXU D-reduction path.
    x3 = jax.random.normal(jax.random.PRNGKey(2), (2, 128, 512), dtype=jnp.float32).astype(jnp.bfloat16)
    y3 = transposed_ln(x3, m, s)
    jax.block_until_ready(y3)
    assert jnp.allclose(y3.astype(jnp.float32), _reference(x3, m, s),
                        atol=2e-2, rtol=2e-2), "mismatch (bf16 / MXU case)"

    print("KERNEL_OK")
</pallas_src>

<mosaic_0001>
module attributes {stable_mosaic.version = 11 : i64} {
  func.func @_transposed_ln_kernel(%arg0: i32, %arg1: i32, %arg2: memref<1xf32, #tpu.memory_space<smem>>, %arg3: memref<1xf32, #tpu.memory_space<smem>>, %arg4: memref<1x4x16xf32, #tpu.memory_space<vmem>>, %arg5: memref<1x4x16xf32, #tpu.memory_space<vmem>>) attributes {dimension_semantics = [#tpu.dimension_semantics<parallel>, #tpu.dimension_semantics<parallel>], iteration_bounds = array<i64: 2, 1>, scalar_prefetch = 0 : i64, scratch_operands = 0 : i64, tpu.core_type = #tpu.core_type<tc>, window_params = [{transform_indices = @transform_0, window_bounds = array<i64: 1>}, {transform_indices = @transform_1, window_bounds = array<i64: 1>}, {transform_indices = @transform_2, window_bounds = array<i64: 1, 4, 16>}, {transform_indices = @transform_3, window_bounds = array<i64: 1, 4, 16>}]} {
    %c0 = arith.constant 0 : index
    %c0_0 = arith.constant 0 : index
    %c0_1 = arith.constant 0 : index
    %0 = vector.load %arg4[%c0, %c0_0, %c0_1] : memref<1x4x16xf32, #tpu.memory_space<vmem>>, vector<1x4x16xf32>
    %1 = vector.shape_cast %0 : vector<1x4x16xf32> to vector<4x16xf32>
    %2 = vector.extract_strided_slice %1 {offsets = [0, 0], sizes = [1, 16], strides = [1, 1]} : vector<4x16xf32> to vector<1x16xf32>
    %3 = vector.broadcast %2 : vector<1x16xf32> to vector<4x16xf32>
    %4 = arith.subf %1, %3 : vector<4x16xf32>
    %cst = arith.constant dense<0.000000e+00> : vector<16xf32>
    %5 = vector.multi_reduction <add>, %4, %cst [0] : vector<4x16xf32> to vector<16xf32>
    %6 = vector.shape_cast %5 : vector<16xf32> to vector<1x16xf32>
    %7 = arith.mulf %4, %4 : vector<4x16xf32>
    %cst_2 = arith.constant dense<0.000000e+00> : vector<16xf32>
    %8 = vector.multi_reduction <add>, %7, %cst_2 [0] : vector<4x16xf32> to vector<16xf32>
    %9 = vector.shape_cast %8 : vector<16xf32> to vector<1x16xf32>
    %cst_3 = arith.constant 2.500000e-01 : f32
    %10 = vector.broadcast %cst_3 : f32 to vector<1x16xf32>
    %11 = arith.mulf %6, %10 : vector<1x16xf32>
    %cst_4 = arith.constant 2.500000e-01 : f32
    %12 = vector.broadcast %cst_4 : f32 to vector<1x16xf32>
    %13 = arith.mulf %9, %12 : vector<1x16xf32>
    %14 = arith.mulf %11, %11 : vector<1x16xf32>
    %15 = arith.subf %13, %14 : vector<1x16xf32>
    %cst_5 = arith.constant 0.000000e+00 : f32
    %16 = vector.broadcast %cst_5 : f32 to vector<1x16xf32>
    %17 = arith.maximumf %15, %16 : vector<1x16xf32>
    %18 = math.rsqrt %17 : vector<1x16xf32>
    %19 = arith.addf %11, %2 : vector<1x16xf32>
    %c0_6 = arith.constant 0 : index
    %20 = memref.load %arg3[%c0_6] : memref<1xf32, #tpu.memory_space<smem>>
    %21 = vector.broadcast %20 : f32 to vector<1x16xf32>
    %22 = arith.mulf %21, %18 : vector<1x16xf32>
    %c0_7 = arith.constant 0 : index
    %23 = memref.load %arg2[%c0_7] : memref<1xf32, #tpu.memory_space<smem>>
    %24 = vector.broadcast %23 : f32 to vector<1x16xf32>
    %25 = arith.subf %19, %24 : vector<1x16xf32>
    %c0_8 = arith.constant 0 : index
    %c0_9 = arith.constant 0 : index
    %c0_10 = arith.constant 0 : index
    %26 = vector.load %arg4[%c0_8, %c0_9, %c0_10] : memref<1x4x16xf32, #tpu.memory_space<vmem>>, vector<1x4x16xf32>
    %27 = vector.shape_cast %26 : vector<1x4x16xf32> to vector<4x16xf32>
    %28 = vector.broadcast %25 : vector<1x16xf32> to vector<4x16xf32>
    %29 = arith.subf %27, %28 : vector<4x16xf32>
    %30 = vector.broadcast %22 : vector<1x16xf32> to vector<4x16xf32>
    %31 = arith.mulf %30, %29 : vector<4x16xf32>
    %c0_11 = arith.constant 0 : index
    %c0_12 = arith.constant 0 : index
    %c0_13 = arith.constant 0 : index
    %32 = vector.load %arg5[%c0_11, %c0_12, %c0_13] : memref<1x4x16xf32, #tpu.memory_space<vmem>>, vector<1x4x16xf32>
    %33 = vector.shape_cast %32 : vector<1x4x16xf32> to vector<4x16xf32>
    %34 = vector.shape_cast %31 : vector<4x16xf32> to vector<1x4x16xf32>
    tpu.vector_store %arg5[%c0_11, %c0_12, %c0_13], %34 {strides = array<i32>} : memref<1x4x16xf32, #tpu.memory_space<vmem>>, vector<1x4x16xf32>,
    return
  }
  func.func @transform_0(%arg0: i32, %arg1: i32) -> i32 {
    %c0_i32 = arith.constant 0 : i32
    %c0_i32_0 = arith.constant 0 : i32
    return %c0_i32 : i32
  }
  func.func @transform_1(%arg0: i32, %arg1: i32) -> i32 {
    %c0_i32 = arith.constant 0 : i32
    %c0_i32_0 = arith.constant 0 : i32
    return %c0_i32 : i32
  }
  func.func @transform_2(%arg0: i32, %arg1: i32) -> (i32, i32, i32) {
    %c0_i32 = arith.constant 0 : i32
    %c0_i32_0 = arith.constant 0 : i32
    return %arg0, %c0_i32, %arg1 : i32, i32, i32
  }
  func.func @transform_3(%arg0: i32, %arg1: i32) -> (i32, i32, i32) {
    %c0_i32 = arith.constant 0 : i32
    %c0_i32_0 = arith.constant 0 : i32
    return %arg0, %c0_i32, %arg1 : i32, i32, i32
  }
}

</mosaic_0001>

<llo_original>
// kernel: tpu_custom_call.1
$region0: #{tpu_custom_call.1}
  #allocation0 [shape = 'u32[]', space=smem, size = 0x4, offset = 0x4, fixed_abs, tag = 'smem constant byte address 0x4 - core index']
  #allocation1 [shape = 'u32[72,128]{1,0:T(1,128)}', space=vmem, size = 0x9000, scoped, tag = 'internal scratch']
  #allocation2 [shape = 'f32[1]{0:T(128)S(6)}', space=smem, size = 0x200, scoped, tag = 'scoped memory for tpu_custom_call.1']
  #allocation3 [shape = 'f32[1]{0:T(128)S(6)}', space=smem, size = 0x200, scoped, tag = 'scoped memory for tpu_custom_call.1']
  %s0 = inlined_call_operand.<no memory space> [shape: f32[1], index: 0, kind: input, shape index: {}]
  %s1 = inlined_call_operand.<no memory space> [shape: f32[1], index: 1, kind: input, shape index: {}]
  %s2 = inlined_call_operand.hbm [shape: f32[2,4,16], index: 2, kind: input, shape index: {}]
  %s3 = inlined_call_operand.hbm [shape: f32[2,4,16], index: 3, kind: output, shape index: {}]
  %s4 = sld [smem:[#allocation0]]
  $region49: #{tpu_custom_call.1} parent=0
    _
  %s6 = ssub.s32 1, %s4
  %s7 = scalar_select 0, %s6, %s4
  %8 = sst [smem:[#allocation2]] %s0
  %9 = sst [smem:[#allocation3]] %s1
  $region1: #{tpu_custom_call.1} parent=0
    #allocation4 [shape = 'u8[4096]{0}', space=vmem, size = 0x1000, scoped, tag = 'input window, operand 2']
    #allocation5 [shape = 's32[2]{0}', space=sflag, size = 0x8, scoped, tag = 'scoped memory for tpu_custom_call.1']
    #allocation6 [shape = 's32[2]{0}', space=sflag, size = 0x8, scoped, tag = 'scoped memory for tpu_custom_call.1']
    #allocation7 [shape = 'u8[4096]{0}', space=vmem, size = 0x1000, scoped, tag = 'output window, operand 0']
    %10 = vsyncpa [#allocation5], 0
    %s11 = scalar_lea.sflag [#allocation5], 1
    %12 = vsyncpa %s11, 0
    %13 = vsyncpa [#allocation6], 0
    %s14 = scalar_lea.sflag [#allocation6], 1
    %15 = vsyncpa %s14, 0
    loop: start=0, step=1, limit=4
    $region2: #{tpu_custom_call.1} parent=1 // loop_pre_header
      _
    $region3: #{tpu_custom_call.1} parent=1 // loop_header
      %s17 = sphi 0, %s21
      %p18 = scmp.ge.s32.totalorder %s17, 4
      %s24 = sphi 0, %s36
      %s25 = sphi 0, %s32
      %s26 = sphi 0, %s24
      %s27 = sphi 0, %s25
      %s28 = sphi 0, %s26
      %s29 = sphi 0, %s27
      %s37 = sphi 0, %s37
      %s39 = sphi 0, %s37
      %s40 = sphi 0, %s39
      %s54 = sphi 0, %s40
      %s58 = sphi 0, %s58
      %s60 = sphi 0, %s58
      %s61 = sphi 0, %s60
      %s75 = sphi 0, %s61
      %s83 = sphi 0, %s85
      %s86 = sphi 0, %s83
      %s87 = sphi 0, %s86
      %s103 = sphi 0, %s87
      %s111 = sphi 0, %s113
      %s114 = sphi 0, %s111
      %s115 = sphi 0, %s114
      %s131 = sphi 0, %s115
    $region4: #{tpu_custom_call.1} parent=1 // loop_header_branch
      %20 = sbr.rel (%p18) target = $region8
    $region5: #{tpu_custom_call.1} parent=1 // loop_body
      %s22 = ssub.s32 %s17, 1
      %s23 = ssub.s32 %s17, 2
      %s30 = sadd.s32 1, %s25
      %p31 = scmp.ge.s32.totalorder %s30, 1
      %s32 = scalar_select %p31, 0, %s30
      %s33 = sadd.s32 1, %s24
      %s34 = scalar_select %p31, %s33, %s24
      %p35 = scmp.ge.s32.totalorder %s34, 2
      %s36 = scalar_select %p35, 0, %s34
      %s38 = sadd.s32 %s37, 1
      %p41 = scmp.eq.s32.totalorder %s17, 1
      %p42 = scmp.ne.s32.totalorder %s37, %s39
      %p43 = scmp.eq.s32.totalorder %s17, 0
      %p44 = por %p42, %p43
      %p45 = scmp.ne.s32.totalorder %s37, %s39
      %p46 = scmp.eq.s32.totalorder %s22, 1
      %p47 = por %p45, %p46
      %p48 = scmp.ne.s32.totalorder %s39, %s40
      %p49 = scmp.eq.s32.totalorder %s22, 0
      %p50 = por %p48, %p49
      %p51 = scmp.ne.s32.totalorder %s39, %s40
      %p52 = scmp.eq.s32.totalorder %s23, 1
      %p53 = por %p51, %p52
      %p55 = scmp.ne.s32.totalorder %s40, %s54
      %p56 = scmp.eq.s32.totalorder %s23, 0
      %p57 = por %p55, %p56
      %s59 = sadd.s32 %s58, 1
      %p62 = scmp.eq.s32.totalorder %s17, 1
      %p63 = scmp.ne.s32.totalorder %s58, %s60
      %p64 = scmp.eq.s32.totalorder %s17, 0
      %p65 = por %p63, %p64
      %p66 = scmp.ne.s32.totalorder %s58, %s60
      %p67 = scmp.eq.s32.totalorder %s22, 1
      %p68 = por %p66, %p67
      %p69 = scmp.ne.s32.totalorder %s60, %s61
      %p70 = scmp.eq.s32.totalorder %s22, 0
      %p71 = por %p69, %p70
      %p72 = scmp.ne.s32.totalorder %s60, %s61
      %p73 = scmp.eq.s32.totalorder %s23, 1
      %p74 = por %p72, %p73
      %p76 = scmp.ne.s32.totalorder %s61, %s75
      %p77 = scmp.eq.s32.totalorder %s23, 0
      %p78 = por %p76, %p77
      %s79 = ssub.s32 %s24, %s36
      %s80 = ssub.s32 %s25, %s32
      %s81 = sor.u32 %s79, %s80
      %p82 = scmp.eq.s32.totalorder %s81, 0
      %s84 = sadd.s32 %s83, 1
      %s85 = scalar_select %p82, %s83, %s84
      %p88 = pneg %p82
      %p89 = scmp.eq.s32.totalorder %s17, 1
      %p90 = por %p88, %p89
      %p91 = scmp.ne.s32.totalorder %s83, %s86
      %p92 = scmp.eq.s32.totalorder %s17, 0
      %p93 = por %p91, %p92
      %p94 = scmp.ne.s32.totalorder %s83, %s86
      %p95 = scmp.eq.s32.totalorder %s22, 1
      %p96 = por %p94, %p95
      %p97 = scmp.ne.s32.totalorder %s86, %s87
      %p98 = scmp.eq.s32.totalorder %s22, 0
      %p99 = por %p97, %p98
      %p100 = scmp.ne.s32.totalorder %s86, %s87
      %p101 = scmp.eq.s32.totalorder %s23, 1
      %p102 = por %p100, %p101
      %p104 = scmp.ne.s32.totalorder %s87, %s103
      %p105 = scmp.eq.s32.totalorder %s23, 0
      %p106 = por %p104, %p105
      %s107 = ssub.s32 %s24, %s36
      %s108 = ssub.s32 %s25, %s32
      %s109 = sor.u32 %s107, %s108
      %p110 = scmp.eq.s32.totalorder %s109, 0
      %s112 = sadd.s32 %s111, 1
      %s113 = scalar_select %p110, %s111, %s112
      %p116 = pneg %p110
      %p117 = scmp.eq.s32.totalorder %s17, 1
      %p118 = por %p116, %p117
      %p119 = scmp.ne.s32.totalorder %s111, %s114
      %p120 = scmp.eq.s32.totalorder %s17, 0
      %p121 = por %p119, %p120
      %p122 = scmp.ne.s32.totalorder %s111, %s114
      %p123 = scmp.eq.s32.totalorder %s22, 1
      %p124 = por %p122, %p123
      %p125 = scmp.ne.s32.totalorder %s114, %s115
      %p126 = scmp.eq.s32.totalorder %s22, 0
      %p127 = por %p125, %p126
      %p128 = scmp.ne.s32.totalorder %s114, %s115
      %p129 = scmp.eq.s32.totalorder %s23, 1
      %p130 = por %p128, %p129
      %p132 = scmp.ne.s32.totalorder %s115, %s131
      %p133 = scmp.eq.s32.totalorder %s23, 0
      %p134 = por %p132, %p133
      %p135 = scmp.le.s32.totalorder 1, %s17
      %p136 = scmp.lt.s32.totalorder %s17, 3
      %p137 = pnand %p135, %p136
      %p138 = pneg %p137
      // Predicated region
      $region9: #{tpu_custom_call.1} parent=5 // pred_check
        _
      $region10: #{tpu_custom_call.1} parent=5 // pred_check_branch
        %140 = sbr.rel (%p137) target = $region12
      $region11: #{tpu_custom_call.1} parent=5 // pred_region
        %s141 = ssub.s32 %s17, 1
        // Predicated region
        $region13: #{tpu_custom_call.1} parent=11 // pred_check
          %p142 = pneg %p50
        $region14: #{tpu_custom_call.1} parent=11 // pred_check_branch
          %144 = sbr.rel (%p142) target = $region16
        $region15: #{tpu_custom_call.1} parent=11 // pred_region
          _
        $region16: #{tpu_custom_call.1} parent=11 // pred_fallthru
          _
        // Predicated region
        $region17: #{tpu_custom_call.1} parent=11 // pred_check
          %p145 = pneg %p71
        $region18: #{tpu_custom_call.1} parent=11 // pred_check_branch
          %147 = sbr.rel (%p145) target = $region20
        $region19: #{tpu_custom_call.1} parent=11 // pred_region
          _
        $region20: #{tpu_custom_call.1} parent=11 // pred_fallthru
          _
      $region12: #{tpu_custom_call.1} parent=5 // pred_fallthru
        _
      %p148 = scmp.lt.s32.totalorder %s17, 2
      // Predicated region
      $region21: #{tpu_custom_call.1} parent=5 // pred_check
        %p149 = pneg %p148
      $region22: #{tpu_custom_call.1} parent=5 // pred_check_branch
        %151 = sbr.rel (%p149) target = $region24
      $region23: #{tpu_custom_call.1} parent=5 // pred_region
        // Predicated region
        $region25: #{tpu_custom_call.1} parent=23 // pred_check
          %p152 = pneg %p93
        $region26: #{tpu_custom_call.1} parent=23 // pred_check_branch
          %154 = sbr.rel (%p152) target = $region28
        $region27: #{tpu_custom_call.1} parent=23 // pred_region
          %s155 = sand.u32 %s83, 1
          %s156 = scalar_lea.sflag [#allocation5], %s155
          %s157 = sand.u32 %s83, 1
          %s158 = smul.addr %s157, 4
          %s159 = scalar_lea.vmem [#allocation4], %s158
          %161 = vsyncadd %s156, 0
          %s162 = sadd.s32 %s25, %s24
          %s163 = smul.addr %s162, 4
          %s164 = scalar_lea.hbm %s2, %s163
          %s166 = sshll.u32 %s164, 4
          %s167 = int_to_ptr.hbm [resolvable:$true] %s166
          %s168 = sshll.u32 %s159, 4
          %s169 = int_to_ptr.vmem [resolvable:$true] %s168
          %171 = dma.hbm_to_vmem [thread:$0]  %s167, 64, %s169, %s156
        $region28: #{tpu_custom_call.1} parent=23 // pred_fallthru
          _
      $region24: #{tpu_custom_call.1} parent=5 // pred_fallthru
        _
      %p172 = scmp.le.s32.totalorder 1, %s17
      %p173 = scmp.lt.s32.totalorder %s17, 3
      %p174 = pnand %p172, %p173
      %p175 = pneg %p174
      // Predicated region
      $region29: #{tpu_custom_call.1} parent=5 // pred_check
        _
      $region30: #{tpu_custom_call.1} parent=5 // pred_check_branch
        %177 = sbr.rel (%p174) target = $region32
      $region31: #{tpu_custom_call.1} parent=5 // pred_region
        %s178 = ssub.s32 %s17, 1
        %s179 = sand.u32 %s86, 1
        %s180 = scalar_lea.sflag [#allocation5], %s179
        %s181 = sand.u32 %s86, 1
        %s182 = smul.addr %s181, 4
        %s183 = scalar_lea.vmem [#allocation4], %s182
        // Predicated region
        $region33: #{tpu_custom_call.1} parent=31 // pred_check
          %p184 = pneg %p99
        $region34: #{tpu_custom_call.1} parent=31 // pred_check_branch
          %186 = sbr.rel (%p184) target = $region36
        $region35: #{tpu_custom_call.1} parent=31 // pred_region
          %188 = dma.done %s180, 64
        $region36: #{tpu_custom_call.1} parent=31 // pred_fallthru
          _
        %p189 = pneg %p50
        %p190 = pneg %p47
        %p191 = pneg %p71
        %p192 = pneg %p68
        %s193 = sand.u32 %s86, 1
        %s194 = scalar_lea.sflag [#allocation5], %s193
        %s195 = sand.u32 %s86, 1
        %s196 = smul.addr %s195, 4
        %s197 = scalar_lea.vmem [#allocation4], %s196
        %p198 = pneg %p99
        %p199 = pneg %p96
        %p200 = pneg %p127
        %p201 = pneg %p124
        %s202 = sand.u32 %s114, 1
        %s203 = scalar_lea.sflag [#allocation6], %s202
        %s204 = sand.u32 %s114, 1
        %s205 = smul.addr %s204, 4
        %s206 = scalar_lea.vmem [#allocation7], %s205
        %v207 = vld [vmem:[%s183] sm:$0xf]
        %v208 = vperm.slane %v207, 0
        %v209 = vsub.f32 %v207, %v208
        %vm210 = vcmask 125952
        %v211 = vsel %vm210, %v209, 0.0
        %v212 = vrot.slane %v211, 4
        %v213 = vadd.f32 %v211, %v212
        %v214 = vrot.slane %v213, 2
        %v215 = vadd.f32 %v213, %v214
        %v216 = vrot.slane %v215, 1
        %v217 = vadd.f32 %v215, %v216
        %v218 = vmul.f32 %v209, %v209
        %v219 = vsel %vm210, %v218, 0.0
        %v220 = vrot.slane %v219, 4
        %v221 = vadd.f32 %v219, %v220
        %v222 = vrot.slane %v221, 2
        %v223 = vadd.f32 %v221, %v222
        %v224 = vrot.slane %v223, 1
        %v225 = vadd.f32 %v223, %v224
        %v226 = vmul.f32 %v217, 0.25
        %v227 = vmul.f32 %v225, 0.25
        %v228 = vmul.f32 %v226, %v226
        %v229 = vsub.f32 %v227, %v228
        %v230 = vmax.f32 %v229, 0.0
        %v231 = vrsqrt.pop %v230
        %v232 = vmul.f32 %v231, %v230
        %v233 = vmul.f32 %v232, %v231
        %v234 = vmul.f32 0.5, %v233
        %v235 = vsub.f32 1.5, %v234
        %v236 = vmul.f32 %v231, %v235
        %vm237 = vweird.f32 %v230
        %vm238 = vweird.f32 %v231
        %vm239 = vmor %vm237, %vm238
        %v240 = vsel %vm239, %v231, %v236
        %v241 = vadd.f32 %v226, %v207
        %s242 = sld [smem:[#allocation3]]
        %v243 = vstv %s242
        %v244 = vmul.f32 %v243, %v240
        %s245 = sld [smem:[#allocation2]]
        %v246 = vstv %s245
        %v247 = vsub.f32 %v241, %v246
        %v248 = vperm.slane %v247, 0
        %v249 = vsub.f32 %v207, %v248
        %v250 = vmul.f32 %v244, %v249
        %251 = vst.msk [vmem:[%s206] sm:$0xf] %vm210, %v250
        %s252 = sand.u32 %s114, 1
        %s253 = scalar_lea.sflag [#allocation6], %s252
        %s254 = sand.u32 %s114, 1
        %s255 = smul.addr %s254, 4
        %s256 = scalar_lea.vmem [#allocation7], %s255
        // Predicated region
        $region37: #{tpu_custom_call.1} parent=31 // pred_check
          %p257 = pneg %p124
        $region38: #{tpu_custom_call.1} parent=31 // pred_check_branch
          %259 = sbr.rel (%p257) target = $region40
        $region39: #{tpu_custom_call.1} parent=31 // pred_region
          %261 = vsyncadd %s253, 0
          %s262 = sadd.s32 %s27, %s26
          %s263 = smul.addr %s262, 4
          %s264 = scalar_lea.hbm %s3, %s263
          %s266 = sshll.u32 %s256, 4
          %s267 = int_to_ptr.vmem [resolvable:$true] %s266
          %s268 = sshll.u32 %s264, 4
          %s269 = int_to_ptr.hbm [resolvable:$true] %s268
          %271 = dma.vmem_to_hbm [thread:$0]  %s267, 64, %s269, %s253
        $region40: #{tpu_custom_call.1} parent=31 // pred_fallthru
          _
      $region32: #{tpu_custom_call.1} parent=5 // pred_fallthru
        _
      %p272 = scmp.le.s32.totalorder 2, %s17
      // Predicated region
      $region41: #{tpu_custom_call.1} parent=5 // pred_check
        %p273 = pneg %p272
      $region42: #{tpu_custom_call.1} parent=5 // pred_check_branch
        %275 = sbr.rel (%p273) target = $region44
      $region43: #{tpu_custom_call.1} parent=5 // pred_region
        %s276 = ssub.s32 %s17, 2
        // Predicated region
        $region45: #{tpu_custom_call.1} parent=43 // pred_check
          %p277 = pneg %p130
        $region46: #{tpu_custom_call.1} parent=43 // pred_check_branch
          %279 = sbr.rel (%p277) target = $region48
        $region47: #{tpu_custom_call.1} parent=43 // pred_region
          %s280 = sand.u32 %s115, 1
          %s281 = scalar_lea.sflag [#allocation6], %s280
          %s282 = sand.u32 %s115, 1
          %s283 = smul.addr %s282, 4
          %s284 = scalar_lea.vmem [#allocation7], %s283
          %286 = dma.done %s281, 64
        $region48: #{tpu_custom_call.1} parent=43 // pred_fallthru
          _
      $region44: #{tpu_custom_call.1} parent=5 // pred_fallthru
        _
    $region6: #{tpu_custom_call.1} parent=1 // loop_footer
      %s21 = sadd.s32 1, %s17
    $region7: #{tpu_custom_call.1} parent=1 // loop_footer_branch
      %16 = sbr.rel target = $region3
    $region8: #{tpu_custom_call.1} parent=1 // loop_exit
      _
    %287 = vsyncpa [#allocation5], 1
    %s288 = scalar_lea.sflag [#allocation5], 1
    %289 = vsyncpa %s288, 1
    %290 = vsyncpa [#allocation6], 1
    %s291 = scalar_lea.sflag [#allocation6], 1
    %292 = vsyncpa %s291, 1

</llo_original>
